<compile_context>
chip_gen: v7x
topology: tpu7x:2x2x1
jax: 0.10.0
libtpu: 0.0.40
codegen_flags: <defaults>
</compile_context>

<pallas_src>
import jax
import jax.numpy as jnp
from jax import lax
from jax.experimental import pallas as pl
from jax.experimental.pallas import tpu as pltpu

IN_DIM = 8
HID = 64
OUT_DIM = 1
LANE = 128
STRIP = 128  # in-kernel column strip (lanes); keeps h1/h2 at ~8 vregs each


def _round_up(n, m):
    return ((n + m - 1) // m) * m


def _choose_tile_strips(n_strips, tb):
    """Pick the batch tile size in 128-lane strips.

    - round the requested tb up to a 128 multiple,
    - cap it so the grid has >=2 steps when possible (v7x dual-TC sharding),
    - pick the largest tile <= target whose padding waste is <= one strip.
    """
    target = max(1, _round_up(max(int(tb), LANE), LANE) // LANE)
    if n_strips >= 2:
        target = min(target, -(-n_strips // 2))
    target = min(target, n_strips)
    for ts in range(target, 0, -1):
        if (-n_strips) % ts <= 1:
            return ts
    return 1


def policy_kernel(x_ref, w1_ref, b1_ref, w2_ref, b2_ref, w3_ref, b3_ref, o_ref):
    # x_ref: (IN_DIM, TB) tile -- batch on the lane axis.
    # Weights are (out, in); biases are (out, 1) columns; b3 is 1-D SMEM.
    w1 = w1_ref[...]                       # (HID, IN_DIM)  act dtype
    w2 = w2_ref[...]                       # (HID, HID)     act dtype
    b1 = b1_ref[...]                       # (HID, 1)       f32
    b2 = b2_ref[...]                       # (HID, 1)       f32
    w3 = w3_ref[...]                       # (HID, 1)       f32
    b3 = b3_ref[0]                         # scalar, read once per grid step

    n_strips = x_ref.shape[-1] // STRIP

    def strip_body(s, carry):
        col = pl.multiple_of(s * STRIP, STRIP)
        xs = x_ref[:, pl.ds(col, STRIP)]                          # (IN_DIM, STRIP)

        a1 = jnp.dot(w1, xs, preferred_element_type=jnp.float32) + b1
        h1 = jnp.tanh(a1)                                         # (HID, STRIP) f32

        # Dropout(0.2) -> identity in eval mode.

        a2 = jnp.dot(w2, h1.astype(w2.dtype),
                     preferred_element_type=jnp.float32) + b2
        h2 = jnp.tanh(a2)                                         # (HID, STRIP) f32

        # Linear(64, 1): VPU broadcast-multiply + sublane (XLU) reduction;
        # avoids a 1-wide MXU result and keeps the store lane-dense.
        v = jnp.sum(w3 * h2, axis=0, keepdims=True) + b3          # (1, STRIP)
        o_ref[:, pl.ds(col, STRIP)] = v
        return carry

    lax.fori_loop(0, n_strips, strip_body, 0, unroll=True)


def policy_forward_t(x_t, params, *, tb=2048, act_dtype=jnp.float32):
    """Core path. x_t: (IN_DIM, B) float32 (batch on the trailing/lane axis).

    Returns (OUT_DIM, B) float32. No transpose passes around the kernel.
    """
    assert x_t.shape[0] == IN_DIM
    B = x_t.shape[1]

    # ---- Fold normalization / de-normalization into the weights (exact). ----
    inv_std = 1.0 / (params["feat_std"] + 1e-6)                        # (1, IN_DIM)
    w1f = params["w1"] * inv_std.reshape(IN_DIM, 1)                    # (IN_DIM, HID)
    b1f = params["b1"] - (params["feat_mean"] * inv_std) @ params["w1"]  # (1, HID)
    w3f = params["w3"] * params["vel_std"]                             # (HID, 1)
    b3f = params["b3"] * params["vel_std"] + params["vel_mean"]        # (1, 1)

    # Kernel-side layouts: weights (out, in), biases (out, 1), batch on lanes.
    w1_k = w1f.T.astype(act_dtype)                # (HID, IN_DIM)
    b1_k = b1f.T.astype(jnp.float32)              # (HID, 1)
    w2_k = params["w2"].T.astype(act_dtype)       # (HID, HID)
    b2_k = params["b2"].T.astype(jnp.float32)     # (HID, 1)
    w3_k = w3f.astype(jnp.float32)                # (HID, 1)
    b3_k = b3f.reshape(1).astype(jnp.float32)     # (1,) -> 1-D SMEM

    # ---- Adaptive batch tiling (waste <= one 128-lane strip). ----
    n_strips = pl.cdiv(max(B, 1), LANE)
    ts = _choose_tile_strips(n_strips, tb)
    tb_act = ts * LANE
    n_tiles = -(-n_strips // ts)
    b_pad = n_tiles * tb_act

    x_k = x_t.astype(act_dtype)
    if b_pad != B:
        x_k = jnp.pad(x_k, ((0, 0), (0, b_pad - B)))

    itemsize = jnp.dtype(act_dtype).itemsize
    cost = pl.CostEstimate(
        flops=2 * b_pad * (IN_DIM * HID + HID * HID + HID),
        transcendentals=2 * HID * b_pad,
        bytes_accessed=(itemsize * b_pad * IN_DIM + 4 * b_pad * OUT_DIM
                        + itemsize * (HID * IN_DIM + HID * HID)
                        + 4 * (2 * HID + HID * OUT_DIM + 1)),
    )

    vmem = pltpu.MemorySpace.VMEM
    out_pad = pl.pallas_call(
        policy_kernel,
        out_shape=jax.ShapeDtypeStruct((OUT_DIM, b_pad), jnp.float32),
        grid=(n_tiles,),
        in_specs=[
            # x tile streams over the batch (double-buffered by Pallas).
            pl.BlockSpec((IN_DIM, tb_act), lambda i: (0, i), memory_space=vmem),
            # Weights / biases: constant index_map -> resident in VMEM.
            pl.BlockSpec((HID, IN_DIM), lambda i: (0, 0), memory_space=vmem),
            pl.BlockSpec((HID, 1), lambda i: (0, 0), memory_space=vmem),
            pl.BlockSpec((HID, HID), lambda i: (0, 0), memory_space=vmem),
            pl.BlockSpec((HID, 1), lambda i: (0, 0), memory_space=vmem),
            pl.BlockSpec((HID, OUT_DIM), lambda i: (0, 0), memory_space=vmem),
            # Folded scalar bias: 1-D SMEM (no padded 2-D SMEM tile).
            pl.BlockSpec(memory_space=pltpu.MemorySpace.SMEM),
        ],
        out_specs=pl.BlockSpec((OUT_DIM, tb_act), lambda i: (0, i),
                               memory_space=vmem),
        compiler_params=pltpu.CompilerParams(
            dimension_semantics=("parallel",),
        ),
        cost_estimate=cost,
    )(x_k, w1_k, b1_k, w2_k, b2_k, w3_k, b3_k)

    return out_pad[:, :B]                                             # (1, B)


def policy_forward(x, params, **kwargs):
    """Layout adapter for callers with x of shape (B, IN_DIM).

    Prefer `policy_forward_t` when the producer can supply (IN_DIM, B) data:
    the transposes here are extra HBM passes outside the kernel.
    """
    return policy_forward_t(x.T, params, **kwargs).T                  # (B, 1)


def init_params(key):
    """Deterministic synthetic parameters (shapes from Policy.__init__)."""
    ks = jax.random.split(key, 6)

    def linear_init(kw, kb, fan_in, fan_out):
        bound = 1.0 / jnp.sqrt(fan_in)
        w = jax.random.uniform(kw, (fan_in, fan_out), jnp.float32, -bound, bound)
        b = jax.random.uniform(kb, (1, fan_out), jnp.float32, -bound, bound)
        return w, b

    w1, b1 = linear_init(ks[0], ks[1], IN_DIM, HID)
    w2, b2 = linear_init(ks[2], ks[3], HID, HID)
    w3, b3 = linear_init(ks[4], ks[5], HID, OUT_DIM)

    feat_mean = jnp.linspace(-1.0, 1.0, IN_DIM, dtype=jnp.float32).reshape(1, IN_DIM)
    feat_std = (0.5 + 0.1 * jnp.arange(IN_DIM, dtype=jnp.float32)).reshape(1, IN_DIM)
    vel_mean = jnp.array([[0.25]], dtype=jnp.float32)
    vel_std = jnp.array([[2.0]], dtype=jnp.float32)

    return {
        "w1": w1, "b1": b1,
        "w2": w2, "b2": b2,
        "w3": w3, "b3": b3,
        "feat_mean": feat_mean, "feat_std": feat_std,
        "vel_mean": vel_mean, "vel_std": vel_std,
    }


def policy_ref(x, p):
    """Pure-JAX reference (mirrors the PyTorch module in eval mode)."""
    xn = (x - p["feat_mean"]) / (p["feat_std"] + 1e-6)
    h1 = jnp.tanh(xn @ p["w1"] + p["b1"])
    h2 = jnp.tanh(h1 @ p["w2"] + p["b2"])
    v = h2 @ p["w3"] + p["b3"]
    return v * p["vel_std"] + p["vel_mean"]


if __name__ == "__main__":
    key = jax.random.PRNGKey(0)
    k_param, k_x = jax.random.split(key)
    params = init_params(k_param)

    # --- Small batch through the (B, IN_DIM) adapter. ---
    B = 16
    x = jax.random.normal(k_x, (B, IN_DIM), dtype=jnp.float32)
    out = jax.block_until_ready(policy_forward(x, params))
    ref = policy_ref(x, params)
    assert out.shape == (B, OUT_DIM)
    assert jnp.allclose(out, ref, atol=1e-4, rtol=1e-4), "small-batch mismatch"

    # --- Larger, non-tile-aligned batch through the transpose-free core path:
    #     exercises adaptive tiling (waste <= 1 strip), multi-step grid
    #     (>= 2 steps for v7x dual-TC) and the in-kernel strip loop. ---
    B2 = 1100
    x2_t = jax.random.normal(jax.random.PRNGKey(1), (IN_DIM, B2), dtype=jnp.float32)
    out2_t = jax.block_until_ready(policy_forward_t(x2_t, params, tb=2048))
    ref2 = policy_ref(x2_t.T, params)
    assert out2_t.shape == (OUT_DIM, B2)
    assert jnp.allclose(out2_t.T, ref2, atol=1e-4, rtol=1e-4), "large-batch mismatch"

    # --- Optional bf16-matmul path (v6e/v7x perf option); looser tolerance. ---
    out_bf_t = jax.block_until_ready(
        policy_forward_t(x2_t, params, tb=2048, act_dtype=jnp.bfloat16))
    assert out_bf_t.shape == (OUT_DIM, B2)
    assert jnp.allclose(out_bf_t.T, ref2, atol=1e-1, rtol=1e-1), "bf16-path mismatch"

    print("KERNEL_OK")
</pallas_src>

<mosaic_0001>
module attributes {stable_mosaic.version = 11 : i64} {
  func.func @policy_kernel(%arg0: i32, %arg1: memref<8x128xf32, #tpu.memory_space<vmem>>, %arg2: memref<64x8xf32, #tpu.memory_space<vmem>>, %arg3: memref<64x1xf32, #tpu.memory_space<vmem>>, %arg4: memref<64x64xf32, #tpu.memory_space<vmem>>, %arg5: memref<64x1xf32, #tpu.memory_space<vmem>>, %arg6: memref<64x1xf32, #tpu.memory_space<vmem>>, %arg7: memref<1xf32, #tpu.memory_space<smem>>, %arg8: memref<1x128xf32, #tpu.memory_space<vmem>>) attributes {dimension_semantics = [#tpu.dimension_semantics<parallel>], iteration_bounds = array<i64: 1>, scalar_prefetch = 0 : i64, scratch_operands = 0 : i64, tpu.core_type = #tpu.core_type<tc>, window_params = [{transform_indices = @transform_0, window_bounds = array<i64: 8, 128>}, {pipeline_mode = #tpu.pipeline_mode<synchronous>, transform_indices = @transform_1, window_bounds = array<i64: 64, 8>}, {pipeline_mode = #tpu.pipeline_mode<synchronous>, transform_indices = @transform_2, window_bounds = array<i64: 64, 1>}, {pipeline_mode = #tpu.pipeline_mode<synchronous>, transform_indices = @transform_3, window_bounds = array<i64: 64, 64>}, {pipeline_mode = #tpu.pipeline_mode<synchronous>, transform_indices = @transform_4, window_bounds = array<i64: 64, 1>}, {pipeline_mode = #tpu.pipeline_mode<synchronous>, transform_indices = @transform_5, window_bounds = array<i64: 64, 1>}, {transform_indices = @transform_6, window_bounds = array<i64: 1>}, {transform_indices = @transform_7, window_bounds = array<i64: 1, 128>}]} {
    %c0 = arith.constant 0 : index
    %c0_0 = arith.constant 0 : index
    %0 = vector.load %arg2[%c0, %c0_0] : memref<64x8xf32, #tpu.memory_space<vmem>>, vector<64x8xf32>
    %c0_1 = arith.constant 0 : index
    %c0_2 = arith.constant 0 : index
    %1 = vector.load %arg4[%c0_1, %c0_2] : memref<64x64xf32, #tpu.memory_space<vmem>>, vector<64x64xf32>
    %c0_3 = arith.constant 0 : index
    %c0_4 = arith.constant 0 : index
    %2 = vector.load %arg3[%c0_3, %c0_4] : memref<64x1xf32, #tpu.memory_space<vmem>>, vector<64x1xf32>
    %c0_5 = arith.constant 0 : index
    %c0_6 = arith.constant 0 : index
    %3 = vector.load %arg5[%c0_5, %c0_6] : memref<64x1xf32, #tpu.memory_space<vmem>>, vector<64x1xf32>
    %c0_7 = arith.constant 0 : index
    %c0_8 = arith.constant 0 : index
    %4 = vector.load %arg6[%c0_7, %c0_8] : memref<64x1xf32, #tpu.memory_space<vmem>>, vector<64x1xf32>
    %c0_9 = arith.constant 0 : index
    %5 = memref.load %arg7[%c0_9] : memref<1xf32, #tpu.memory_space<smem>>
    %c0_i32 = arith.constant 0 : i32
    %c128_i32 = arith.constant 128 : i32
    %6 = arith.muli %c0_i32, %c128_i32 : i32
    %7 = tpu.assume_multiple %6, 128 : i32
    %c0_10 = arith.constant 0 : index
    %8 = arith.index_cast %7 : i32 to index
    %9 = vector.load %arg1[%c0_10, %8] : memref<8x128xf32, #tpu.memory_space<vmem>>, vector<8x128xf32>
    %cst = arith.constant dense<0.000000e+00> : vector<64x128xf32>
    %10 = tpu.matmul %0, %9, %cst {dimension_numbers = #tpu.dot_dimension_numbers<[1], [0], [0], [1], [0, 0, 1, 1], [], []>} : vector<64x8xf32>, vector<8x128xf32>, vector<64x128xf32> -> vector<64x128xf32>
    %11 = vector.broadcast %2 : vector<64x1xf32> to vector<64x128xf32>
    %12 = arith.addf %10, %11 : vector<64x128xf32>
    %13 = math.tanh %12 : vector<64x128xf32>
    %cst_11 = arith.constant dense<0.000000e+00> : vector<64x128xf32>
    %14 = tpu.matmul %1, %13, %cst_11 {dimension_numbers = #tpu.dot_dimension_numbers<[1], [0], [0], [1], [0, 0, 1, 1], [], []>} : vector<64x64xf32>, vector<64x128xf32>, vector<64x128xf32> -> vector<64x128xf32>
    %15 = vector.broadcast %3 : vector<64x1xf32> to vector<64x128xf32>
    %16 = arith.addf %14, %15 : vector<64x128xf32>
    %17 = math.tanh %16 : vector<64x128xf32>
    %18 = vector.broadcast %4 : vector<64x1xf32> to vector<64x128xf32>
    %19 = arith.mulf %18, %17 : vector<64x128xf32>
    %cst_12 = arith.constant dense<0.000000e+00> : vector<128xf32>
    %20 = vector.multi_reduction <add>, %19, %cst_12 [0] : vector<64x128xf32> to vector<128xf32>
    %21 = vector.shape_cast %20 : vector<128xf32> to vector<1x128xf32>
    %22 = vector.broadcast %5 : f32 to vector<1x128xf32>
    %23 = arith.addf %21, %22 : vector<1x128xf32>
    %c0_13 = arith.constant 0 : index
    %24 = arith.index_cast %7 : i32 to index
    %25 = vector.load %arg8[%c0_13, %24] : memref<1x128xf32, #tpu.memory_space<vmem>>, vector<1x128xf32>
    tpu.vector_store %arg8[%c0_13, %24], %23 {strides = array<i32>} : memref<1x128xf32, #tpu.memory_space<vmem>>, vector<1x128xf32>,
    %c1_i32 = arith.constant 1 : i32
    return
  }
  func.func @transform_0(%arg0: i32) -> (i32, i32) {
    %c0_i32 = arith.constant 0 : i32
    %c0_i32_0 = arith.constant 0 : i32
    return %c0_i32, %arg0 : i32, i32
  }
  func.func @transform_1(%arg0: i32) -> (i32, i32) {
    %c0_i32 = arith.constant 0 : i32
    %c0_i32_0 = arith.constant 0 : i32
    %c0_i32_1 = arith.constant 0 : i32
    return %c0_i32, %c0_i32_0 : i32, i32
  }
  func.func @transform_2(%arg0: i32) -> (i32, i32) {
    %c0_i32 = arith.constant 0 : i32
    %c0_i32_0 = arith.constant 0 : i32
    %c0_i32_1 = arith.constant 0 : i32
    return %c0_i32, %c0_i32_0 : i32, i32
  }
  func.func @transform_3(%arg0: i32) -> (i32, i32) {
    %c0_i32 = arith.constant 0 : i32
    %c0_i32_0 = arith.constant 0 : i32
    %c0_i32_1 = arith.constant 0 : i32
    return %c0_i32, %c0_i32_0 : i32, i32
  }
  func.func @transform_4(%arg0: i32) -> (i32, i32) {
    %c0_i32 = arith.constant 0 : i32
    %c0_i32_0 = arith.constant 0 : i32
    %c0_i32_1 = arith.constant 0 : i32
    return %c0_i32, %c0_i32_0 : i32, i32
  }
  func.func @transform_5(%arg0: i32) -> (i32, i32) {
    %c0_i32 = arith.constant 0 : i32
    %c0_i32_0 = arith.constant 0 : i32
    %c0_i32_1 = arith.constant 0 : i32
    return %c0_i32, %c0_i32_0 : i32, i32
  }
  func.func @transform_6(%arg0: i32) -> i32 {
    %c0_i32 = arith.constant 0 : i32
    %c0_i32_0 = arith.constant 0 : i32
    return %c0_i32 : i32
  }
  func.func @transform_7(%arg0: i32) -> (i32, i32) {
    %c0_i32 = arith.constant 0 : i32
    %c0_i32_0 = arith.constant 0 : i32
    return %c0_i32, %arg0 : i32, i32
  }
}

</mosaic_0001>

<llo_original>
// kernel: tpu_custom_call.1
$region0: #{tpu_custom_call.1}
  #allocation0 [shape = 'u32[]', space=smem, size = 0x4, offset = 0x4, fixed_abs, tag = 'smem constant byte address 0x4 - core index']
  #allocation1 [shape = 'u32[144,128]{1,0:T(1,128)}', space=vmem, size = 0x12000, scoped, tag = 'internal scratch']
  #allocation2 [shape = 'f32[1]{0:T(128)S(6)}', space=smem, size = 0x200, scoped, tag = 'scoped memory for tpu_custom_call.1']
  %s0 = inlined_call_operand.vmem [shape: f32[8,128], index: 0, kind: input, shape index: {}]
  %s1 = inlined_call_operand.vmem [shape: f32[64,8], index: 1, kind: input, shape index: {}]
  %s2 = inlined_call_operand.vmem [shape: f32[64,1], index: 2, kind: input, shape index: {}]
  %s3 = inlined_call_operand.vmem [shape: f32[64,64], index: 3, kind: input, shape index: {}]
  %s4 = inlined_call_operand.vmem [shape: f32[64,1], index: 4, kind: input, shape index: {}]
  %s5 = inlined_call_operand.vmem [shape: f32[64,1], index: 5, kind: input, shape index: {}]
  %s6 = inlined_call_operand.<no memory space> [shape: f32[1], index: 6, kind: input, shape index: {}]
  %s7 = inlined_call_operand.hbm [shape: f32[1,128], index: 7, kind: output, shape index: {}]
  %s8 = sld [smem:[#allocation0]]
  $region38: #{tpu_custom_call.1} parent=0
    _
  %s10 = ssub.s32 1, %s8
  %s11 = scalar_select 0, %s10, %s8
  %12 = sst [smem:[#allocation2]] %s6
  $region1: #{tpu_custom_call.1} parent=0
    #allocation3 [shape = 'u8[512]{0}', space=vmem, size = 0x400, scoped, tag = 'output window, operand 0, single buffered']
    #allocation4 [shape = 's32[1]{0}', space=sflag, size = 0x4, scoped, tag = 'scoped memory for tpu_custom_call.1']
    %13 = vsyncpa [#allocation4], 0
    // Predicated region
    $region2: #{tpu_custom_call.1} parent=1 // pred_check
      _
    $region3: #{tpu_custom_call.1} parent=1 // pred_check_branch
      %15 = sbr.rel (0) target = $region5
    $region4: #{tpu_custom_call.1} parent=1 // pred_region
      _
    $region5: #{tpu_custom_call.1} parent=1 // pred_fallthru
      _
    // Predicated region
    $region6: #{tpu_custom_call.1} parent=1 // pred_check
      _
    $region7: #{tpu_custom_call.1} parent=1 // pred_check_branch
      %17 = sbr.rel (0) target = $region9
    $region8: #{tpu_custom_call.1} parent=1 // pred_region
      _
    $region9: #{tpu_custom_call.1} parent=1 // pred_fallthru
      _
    // Predicated region
    $region10: #{tpu_custom_call.1} parent=1 // pred_check
      _
    $region11: #{tpu_custom_call.1} parent=1 // pred_check_branch
      %19 = sbr.rel (0) target = $region13
    $region12: #{tpu_custom_call.1} parent=1 // pred_region
      _
    $region13: #{tpu_custom_call.1} parent=1 // pred_fallthru
      _
    // Predicated region
    $region14: #{tpu_custom_call.1} parent=1 // pred_check
      _
    $region15: #{tpu_custom_call.1} parent=1 // pred_check_branch
      %21 = sbr.rel (0) target = $region17
    $region16: #{tpu_custom_call.1} parent=1 // pred_region
      _
    $region17: #{tpu_custom_call.1} parent=1 // pred_fallthru
      _
    // Predicated region
    $region18: #{tpu_custom_call.1} parent=1 // pred_check
      _
    $region19: #{tpu_custom_call.1} parent=1 // pred_check_branch
      %23 = sbr.rel (0) target = $region21
    $region20: #{tpu_custom_call.1} parent=1 // pred_region
      _
    $region21: #{tpu_custom_call.1} parent=1 // pred_fallthru
      _
    // Predicated region
    $region22: #{tpu_custom_call.1} parent=1 // pred_check
      _
    $region23: #{tpu_custom_call.1} parent=1 // pred_check_branch
      %25 = sbr.rel (0) target = $region25
    $region24: #{tpu_custom_call.1} parent=1 // pred_region
      _
    $region25: #{tpu_custom_call.1} parent=1 // pred_fallthru
      _
    // Predicated region
    $region26: #{tpu_custom_call.1} parent=1 // pred_check
      _
    $region27: #{tpu_custom_call.1} parent=1 // pred_check_branch
      %27 = sbr.rel (0) target = $region29
    $region28: #{tpu_custom_call.1} parent=1 // pred_region
      _
    $region29: #{tpu_custom_call.1} parent=1 // pred_fallthru
      _
    %v28 = vld [vmem:[%s1] sm:$0xff]
    %v29 = vld [vmem:[%s1 + $0x8] sm:$0xff]
    %v30 = vld [vmem:[%s1 + $0x10] sm:$0xff]
    %v31 = vld [vmem:[%s1 + $0x18] sm:$0xff]
    %v32 = vld [vmem:[%s1 + $0x20] sm:$0xff]
    %v33 = vld [vmem:[%s1 + $0x28] sm:$0xff]
    %v34 = vld [vmem:[%s1 + $0x30] sm:$0xff]
    %v35 = vld [vmem:[%s1 + $0x38] sm:$0xff]
    %v36 = vld [vmem:[%s3] sm:$0xff]
    %v37 = vld [vmem:[%s3 + $0x8] sm:$0xff]
    %v38 = vld [vmem:[%s3 + $0x10] sm:$0xff]
    %v39 = vld [vmem:[%s3 + $0x18] sm:$0xff]
    %v40 = vld [vmem:[%s3 + $0x20] sm:$0xff]
    %v41 = vld [vmem:[%s3 + $0x28] sm:$0xff]
    %v42 = vld [vmem:[%s3 + $0x30] sm:$0xff]
    %v43 = vld [vmem:[%s3 + $0x38] sm:$0xff]
    %v44 = vld [vmem:[%s2] sm:$0xff]
    %v45 = vld [vmem:[%s2 + $0x8] sm:$0xff]
    %v46 = vld [vmem:[%s2 + $0x10] sm:$0xff]
    %v47 = vld [vmem:[%s2 + $0x18] sm:$0xff]
    %v48 = vld [vmem:[%s2 + $0x20] sm:$0xff]
    %v49 = vld [vmem:[%s2 + $0x28] sm:$0xff]
    %v50 = vld [vmem:[%s2 + $0x30] sm:$0xff]
    %v51 = vld [vmem:[%s2 + $0x38] sm:$0xff]
    %v52 = vld [vmem:[%s4] sm:$0xff]
    %v53 = vld [vmem:[%s4 + $0x8] sm:$0xff]
    %v54 = vld [vmem:[%s4 + $0x10] sm:$0xff]
    %v55 = vld [vmem:[%s4 + $0x18] sm:$0xff]
    %v56 = vld [vmem:[%s4 + $0x20] sm:$0xff]
    %v57 = vld [vmem:[%s4 + $0x28] sm:$0xff]
    %v58 = vld [vmem:[%s4 + $0x30] sm:$0xff]
    %v59 = vld [vmem:[%s4 + $0x38] sm:$0xff]
    %v60 = vld [vmem:[%s5] sm:$0xff]
    %v61 = vld [vmem:[%s5 + $0x8] sm:$0xff]
    %v62 = vld [vmem:[%s5 + $0x10] sm:$0xff]
    %v63 = vld [vmem:[%s5 + $0x18] sm:$0xff]
    %v64 = vld [vmem:[%s5 + $0x20] sm:$0xff]
    %v65 = vld [vmem:[%s5 + $0x28] sm:$0xff]
    %v66 = vld [vmem:[%s5 + $0x30] sm:$0xff]
    %v67 = vld [vmem:[%s5 + $0x38] sm:$0xff]
    %s68 = sld [smem:[#allocation2]]
    %v69 = vld [vmem:[%s0] sm:$0xff]
    %71 = vset.pattern.permute.xlu0 0
    %72 = vperm.xlu0 %71, %v44
    %v73 = vpop.permute.xlu0 %72
    %76 = vset.pattern.permute.xlu0 0
    %77 = vperm.xlu0 %76, %v45
    %v78 = vpop.permute.xlu0 %77
    %81 = vset.pattern.permute.xlu0 0
    %82 = vperm.xlu0 %81, %v46
    %v83 = vpop.permute.xlu0 %82
    %86 = vset.pattern.permute.xlu0 0
    %87 = vperm.xlu0 %86, %v47
    %v88 = vpop.permute.xlu0 %87
    %91 = vset.pattern.permute.xlu0 0
    %92 = vperm.xlu0 %91, %v48
    %v93 = vpop.permute.xlu0 %92
    %96 = vset.pattern.permute.xlu0 0
    %97 = vperm.xlu0 %96, %v49
    %v98 = vpop.permute.xlu0 %97
    %101 = vset.pattern.permute.xlu0 0
    %102 = vperm.xlu0 %101, %v50
    %v103 = vpop.permute.xlu0 %102
    %106 = vset.pattern.permute.xlu0 0
    %107 = vperm.xlu0 %106, %v51
    %v108 = vpop.permute.xlu0 %107
    %vm110 = vcmask 64512
    %v112 = vsel %vm110, %v28, 0
    %v115 = vsel %vm110, %v29, 0
    %v118 = vsel %vm110, %v30, 0
    %v121 = vsel %vm110, %v31, 0
    %v124 = vsel %vm110, %v32, 0
    %v127 = vsel %vm110, %v33, 0
    %v130 = vsel %vm110, %v34, 0
    %v133 = vsel %vm110, %v35, 0
    %135 = vmatprep.subr.mxu0 0.0
    %136 = vmatpush1.msra.mxu0 %v69
    %137 = vmatprep.subr.mxu0 0.0
    %138 = vmatpush1.msra.mxu0 0.0
    %139 = vmatprep.subr.mxu0 0.0
    %140 = vmatpush1.msra.mxu0 0.0
    %141 = vmatprep.subr.mxu0 0.0
    %142 = vmatpush1.msra.mxu0 0.0
    %143 = vmatprep.subr.mxu0 0.0
    %144 = vmatpush1.msra.mxu0 0.0
    %145 = vmatprep.subr.mxu0 0.0
    %146 = vmatpush1.msra.mxu0 0.0
    %147 = vmatprep.subr.mxu0 0.0
    %148 = vmatpush1.msra.mxu0 0.0
    %149 = vmatprep.subr.mxu0 0.0
    %150 = vmatpush1.msra.mxu0 0.0
    %151 = vmatprep.subr.mxu0 0.0
    %152 = vmatpush1.msra.mxu0 0.0
    %153 = vmatprep.subr.mxu0 0.0
    %154 = vmatpush1.msra.mxu0 0.0
    %155 = vmatprep.subr.mxu0 0.0
    %156 = vmatpush1.msra.mxu0 0.0
    %157 = vmatprep.subr.mxu0 0.0
    %158 = vmatpush1.msra.mxu0 0.0
    %159 = vmatprep.subr.mxu0 0.0
    %160 = vmatpush1.msra.mxu0 0.0
    %161 = vmatprep.subr.mxu0 0.0
    %162 = vmatpush1.msra.mxu0 0.0
    %163 = vmatprep.subr.mxu0 0.0
    %164 = vmatpush1.msra.mxu0 0.0
    %165 = vmatprep.subr.mxu0 0.0
    %166 = vmatpush1.msra.mxu0 0.0
    %167 = vmatprep.subr.mxu0 0.0
    %168 = vmatpush1.msra.mxu0 0.0
    %169 = vmatprep.subr.mxu0 0.0
    %170 = vmatpush1.msra.mxu0 0.0
    %171 = vmatprep.subr.mxu0 0.0
    %172 = vmatpush1.msra.mxu0 0.0
    %173 = vmatprep.subr.mxu0 0.0
    %174 = vmatpush1.msra.mxu0 0.0
    %175 = vmatprep.subr.mxu0 0.0
    %176 = vmatpush1.msra.mxu0 0.0
    %177 = vmatprep.subr.mxu0 0.0
    %178 = vmatpush1.msra.mxu0 0.0
    %179 = vmatprep.subr.mxu0 0.0
    %180 = vmatpush1.msra.mxu0 0.0
    %181 = vmatprep.subr.mxu0 0.0
    %182 = vmatpush1.msra.mxu0 0.0
    %183 = vmatprep.subr.mxu0 0.0
    %184 = vmatpush1.msra.mxu0 0.0
    %185 = vmatprep.subr.mxu0 0.0
    %186 = vmatpush1.msra.mxu0 0.0
    %187 = vmatprep.subr.mxu0 0.0
    %188 = vmatpush1.msra.mxu0 0.0
    %189 = vmatprep.subr.mxu0 0.0
    %190 = vmatpush1.msra.mxu0 0.0
    %191 = vmatprep.subr.mxu0 0.0
    %192 = vmatpush1.msra.mxu0 0.0
    %193 = vmatprep.subr.mxu0 0.0
    %194 = vmatpush1.msra.mxu0 0.0
    %195 = vmatprep.subr.mxu0 0.0
    %196 = vmatpush1.msra.mxu0 0.0
    %197 = vmatprep.subr.mxu0 0.0
    %198 = vmatpush1.msra.mxu0 0.0
    %199 = vmatprep.mubr.f32.mxu0 0.0
    %200 = vmatmul.mubr.f32.gmra.mrb[0].mxu0 %v112
    %v201 = vpop.f32.mrb[0].mxu0
    %v202 = vadd.f32 %v73, %v201
    %v203 = vpop.f32.mrb[0].mxu0
    %204 = vmatprep.mubr.f32.mxu0 0.0
    %205 = vmatmul.mubr.f32.gmra.mrb[0].mxu0 %v115
    %v206 = vpop.f32.mrb[0].mxu0
    %v207 = vadd.f32 %v78, %v206
    %v208 = vpop.f32.mrb[0].mxu0
    %209 = vmatprep.mubr.f32.mxu0 0.0
    %210 = vmatmul.mubr.f32.gmra.mrb[0].mxu0 %v118
    %v211 = vpop.f32.mrb[0].mxu0
    %v212 = vadd.f32 %v83, %v211
    %v213 = vpop.f32.mrb[0].mxu0
    %214 = vmatprep.mubr.f32.mxu0 0.0
    %215 = vmatmul.mubr.f32.gmra.mrb[0].mxu0 %v121
    %v216 = vpop.f32.mrb[0].mxu0
    %v217 = vadd.f32 %v88, %v216
    %v218 = vpop.f32.mrb[0].mxu0
    %219 = vmatprep.mubr.f32.mxu0 0.0
    %220 = vmatmul.mubr.f32.gmra.mrb[0].mxu0 %v124
    %v221 = vpop.f32.mrb[0].mxu0
    %v222 = vadd.f32 %v93, %v221
    %v223 = vpop.f32.mrb[0].mxu0
    %224 = vmatprep.mubr.f32.mxu0 0.0
    %225 = vmatmul.mubr.f32.gmra.mrb[0].mxu0 %v127
    %v226 = vpop.f32.mrb[0].mxu0
    %v227 = vadd.f32 %v98, %v226
    %v228 = vpop.f32.mrb[0].mxu0
    %229 = vmatprep.mubr.f32.mxu0 0.0
    %230 = vmatmul.mubr.f32.gmra.mrb[0].mxu0 %v130
    %v231 = vpop.f32.mrb[0].mxu0
    %v232 = vadd.f32 %v103, %v231
    %v233 = vpop.f32.mrb[0].mxu0
    %234 = vmatprep.mubr.f32.mxu0 0.0
    %235 = vmatmul.mubr.f32.gmra.mrb[0].mxu0 %v133
    %v236 = vpop.f32.mrb[0].mxu0
    %v237 = vadd.f32 %v108, %v236
    %v238 = vpop.f32.mrb[0].mxu0
    %239 = vdwg.mxu0
    %v240 = vtanh.pop %v202
    %v241 = vtanh.pop %v207
    %v242 = vtanh.pop %v212
    %v243 = vtanh.pop %v217
    %v244 = vtanh.pop %v222
    %v245 = vtanh.pop %v227
    %v246 = vtanh.pop %v232
    %v247 = vtanh.pop %v237
    %249 = vset.pattern.permute.xlu0 0
    %250 = vperm.xlu0 %249, %v52
    %v251 = vpop.permute.xlu0 %250
    %254 = vset.pattern.permute.xlu0 0
    %255 = vperm.xlu0 %254, %v53
    %v256 = vpop.permute.xlu0 %255
    %259 = vset.pattern.permute.xlu0 0
    %260 = vperm.xlu0 %259, %v54
    %v261 = vpop.permute.xlu0 %260
    %264 = vset.pattern.permute.xlu0 0
    %265 = vperm.xlu0 %264, %v55
    %v266 = vpop.permute.xlu0 %265
    %269 = vset.pattern.permute.xlu0 0
    %270 = vperm.xlu0 %269, %v56
    %v271 = vpop.permute.xlu0 %270
    %274 = vset.pattern.permute.xlu0 0
    %275 = vperm.xlu0 %274, %v57
    %v276 = vpop.permute.xlu0 %275
    %279 = vset.pattern.permute.xlu0 0
    %280 = vperm.xlu0 %279, %v58
    %v281 = vpop.permute.xlu0 %280
    %284 = vset.pattern.permute.xlu0 0
    %285 = vperm.xlu0 %284, %v59
    %v286 = vpop.permute.xlu0 %285
    %vm288 = vcmask 523264
    %v290 = vsel %vm288, %v36, 0
    %v293 = vsel %vm288, %v37, 0
    %v296 = vsel %vm288, %v38, 0
    %v299 = vsel %vm288, %v39, 0
    %v302 = vsel %vm288, %v40, 0
    %v305 = vsel %vm288, %v41, 0
    %v308 = vsel %vm288, %v42, 0
    %v311 = vsel %vm288, %v43, 0
    %313 = vmatprep.subr.mxu0 0.0
    %314 = vmatpush1.msra.mxu0 %v240
    %315 = vmatprep.subr.mxu0 0.0
    %316 = vmatpush1.msra.mxu0 %v241
    %317 = vmatprep.subr.mxu0 0.0
    %318 = vmatpush1.msra.mxu0 %v242
    %319 = vmatprep.subr.mxu0 0.0
    %320 = vmatpush1.msra.mxu0 %v243
    %321 = vmatprep.subr.mxu0 0.0
    %322 = vmatpush1.msra.mxu0 %v244
    %323 = vmatprep.subr.mxu0 0.0
    %324 = vmatpush1.msra.mxu0 %v245
    %325 = vmatprep.subr.mxu0 0.0
    %326 = vmatpush1.msra.mxu0 %v246
    %327 = vmatprep.subr.mxu0 0.0
    %328 = vmatpush1.msra.mxu0 %v247
    %329 = vmatprep.subr.mxu0 0.0
    %330 = vmatpush1.msra.mxu0 0.0
    %331 = vmatprep.subr.mxu0 0.0
    %332 = vmatpush1.msra.mxu0 0.0
    %333 = vmatprep.subr.mxu0 0.0
    %334 = vmatpush1.msra.mxu0 0.0
    %335 = vmatprep.subr.mxu0 0.0
    %336 = vmatpush1.msra.mxu0 0.0
    %337 = vmatprep.subr.mxu0 0.0
    %338 = vmatpush1.msra.mxu0 0.0
    %339 = vmatprep.subr.mxu0 0.0
    %340 = vmatpush1.msra.mxu0 0.0
    %341 = vmatprep.subr.mxu0 0.0
    %342 = vmatpush1.msra.mxu0 0.0
    %343 = vmatprep.subr.mxu0 0.0
    %344 = vmatpush1.msra.mxu0 0.0
    %345 = vmatprep.subr.mxu0 0.0
    %346 = vmatpush1.msra.mxu0 0.0
    %347 = vmatprep.subr.mxu0 0.0
    %348 = vmatpush1.msra.mxu0 0.0
    %349 = vmatprep.subr.mxu0 0.0
    %350 = vmatpush1.msra.mxu0 0.0
    %351 = vmatprep.subr.mxu0 0.0
    %352 = vmatpush1.msra.mxu0 0.0
    %353 = vmatprep.subr.mxu0 0.0
    %354 = vmatpush1.msra.mxu0 0.0
    %355 = vmatprep.subr.mxu0 0.0
    %356 = vmatpush1.msra.mxu0 0.0
    %357 = vmatprep.subr.mxu0 0.0
    %358 = vmatpush1.msra.mxu0 0.0
    %359 = vmatprep.subr.mxu0 0.0
    %360 = vmatpush1.msra.mxu0 0.0
    %361 = vmatprep.subr.mxu0 0.0
    %362 = vmatpush1.msra.mxu0 0.0
    %363 = vmatprep.subr.mxu0 0.0
    %364 = vmatpush1.msra.mxu0 0.0
    %365 = vmatprep.subr.mxu0 0.0
    %366 = vmatpush1.msra.mxu0 0.0
    %367 = vmatprep.subr.mxu0 0.0
    %368 = vmatpush1.msra.mxu0 0.0
    %369 = vmatprep.subr.mxu0 0.0
    %370 = vmatpush1.msra.mxu0 0.0
    %371 = vmatprep.subr.mxu0 0.0
    %372 = vmatpush1.msra.mxu0 0.0
    %373 = vmatprep.subr.mxu0 0.0
    %374 = vmatpush1.msra.mxu0 0.0
    %375 = vmatprep.subr.mxu0 0.0
    %376 = vmatpush1.msra.mxu0 0.0
    %377 = vmatprep.mubr.f32.mxu0 0.0
    %378 = vmatmul.mubr.f32.gmra.mrb[0].mxu0 %v290
    %v379 = vpop.f32.mrb[0].mxu0
    %v380 = vadd.f32 %v251, %v379
    %v381 = vpop.f32.mrb[0].mxu0
    %382 = vmatprep.mubr.f32.mxu0 0.0
    %383 = vmatmul.mubr.f32.gmra.mrb[0].mxu0 %v293
    %v384 = vpop.f32.mrb[0].mxu0
    %v385 = vadd.f32 %v256, %v384
    %v386 = vpop.f32.mrb[0].mxu0
    %387 = vmatprep.mubr.f32.mxu0 0.0
    %388 = vmatmul.mubr.f32.gmra.mrb[0].mxu0 %v296
    %v389 = vpop.f32.mrb[0].mxu0
    %v390 = vadd.f32 %v261, %v389
    %v391 = vpop.f32.mrb[0].mxu0
    %392 = vmatprep.mubr.f32.mxu0 0.0
    %393 = vmatmul.mubr.f32.gmra.mrb[0].mxu0 %v299
    %v394 = vpop.f32.mrb[0].mxu0
    %v395 = vadd.f32 %v266, %v394
    %v396 = vpop.f32.mrb[0].mxu0
    %397 = vmatprep.mubr.f32.mxu0 0.0
    %398 = vmatmul.mubr.f32.gmra.mrb[0].mxu0 %v302
    %v399 = vpop.f32.mrb[0].mxu0
    %v400 = vadd.f32 %v271, %v399
    %v401 = vpop.f32.mrb[0].mxu0
    %402 = vmatprep.mubr.f32.mxu0 0.0
    %403 = vmatmul.mubr.f32.gmra.mrb[0].mxu0 %v305
    %v404 = vpop.f32.mrb[0].mxu0
    %v405 = vadd.f32 %v276, %v404
    %v406 = vpop.f32.mrb[0].mxu0
    %407 = vmatprep.mubr.f32.mxu0 0.0
    %408 = vmatmul.mubr.f32.gmra.mrb[0].mxu0 %v308
    %v409 = vpop.f32.mrb[0].mxu0
    %v410 = vadd.f32 %v281, %v409
    %v411 = vpop.f32.mrb[0].mxu0
    %412 = vmatprep.mubr.f32.mxu0 0.0
    %413 = vmatmul.mubr.f32.gmra.mrb[0].mxu0 %v311
    %v414 = vpop.f32.mrb[0].mxu0
    %v415 = vadd.f32 %v286, %v414
    %v416 = vpop.f32.mrb[0].mxu0
    %417 = vdwg.mxu0
    %v418 = vtanh.pop %v380
    %v419 = vtanh.pop %v385
    %v420 = vtanh.pop %v390
    %v421 = vtanh.pop %v395
    %v422 = vtanh.pop %v400
    %v423 = vtanh.pop %v405
    %v424 = vtanh.pop %v410
    %v425 = vtanh.pop %v415
    %427 = vset.pattern.permute.xlu0 0
    %428 = vperm.xlu0 %427, %v60
    %v429 = vpop.permute.xlu0 %428
    %432 = vset.pattern.permute.xlu0 0
    %433 = vperm.xlu0 %432, %v61
    %v434 = vpop.permute.xlu0 %433
    %437 = vset.pattern.permute.xlu0 0
    %438 = vperm.xlu0 %437, %v62
    %v439 = vpop.permute.xlu0 %438
    %442 = vset.pattern.permute.xlu0 0
    %443 = vperm.xlu0 %442, %v63
    %v444 = vpop.permute.xlu0 %443
    %447 = vset.pattern.permute.xlu0 0
    %448 = vperm.xlu0 %447, %v64
    %v449 = vpop.permute.xlu0 %448
    %452 = vset.pattern.permute.xlu0 0
    %453 = vperm.xlu0 %452, %v65
    %v454 = vpop.permute.xlu0 %453
    %457 = vset.pattern.permute.xlu0 0
    %458 = vperm.xlu0 %457, %v66
    %v459 = vpop.permute.xlu0 %458
    %462 = vset.pattern.permute.xlu0 0
    %463 = vperm.xlu0 %462, %v67
    %v464 = vpop.permute.xlu0 %463
    %v466 = vmul.f32 %v429, %v418
    %v467 = vmul.f32 %v434, %v419
    %v468 = vmul.f32 %v439, %v420
    %v469 = vmul.f32 %v444, %v421
    %v470 = vmul.f32 %v449, %v422
    %v471 = vmul.f32 %v454, %v423
    %v472 = vmul.f32 %v459, %v424
    %v473 = vmul.f32 %v464, %v425
    %v474 = vadd.f32 %v466, %v467
    %v475 = vadd.f32 %v474, %v468
    %v476 = vadd.f32 %v475, %v469
    %v477 = vadd.f32 %v476, %v470
    %v478 = vadd.f32 %v477, %v471
    %v479 = vadd.f32 %v478, %v472
    %v480 = vadd.f32 %v479, %v473
    %v481 = vrot.slane %v480, 4
    %v482 = vadd.f32 %v480, %v481
    %v483 = vrot.slane %v482, 2
    %v484 = vadd.f32 %v482, %v483
    %v485 = vrot.slane %v484, 1
    %v486 = vadd.f32 %v484, %v485
    %v487 = vstv %s68
    %v488 = vadd.f32 %v486, %v487
    %489 = vst [vmem:[#allocation3] sm:$0x1] %v488
    // Predicated region
    $region30: #{tpu_custom_call.1} parent=1 // pred_check
      _
    $region31: #{tpu_custom_call.1} parent=1 // pred_check_branch
      %491 = sbr.rel (0) target = $region33
    $region32: #{tpu_custom_call.1} parent=1 // pred_region
      %s493 = ssub.s32 16, 16
      %494 = vsyncadd [#allocation4], %s493
      %s496 = sshll.u32 [#allocation3], 4
      %s497 = int_to_ptr.vmem [resolvable:$true] %s496
      %499 = dma.vmem_to_hbm [thread:$0]  %s497, 16, %s7, [#allocation4]
    $region33: #{tpu_custom_call.1} parent=1 // pred_fallthru
      _
    // Predicated region
    $region34: #{tpu_custom_call.1} parent=1 // pred_check
      _
    $region35: #{tpu_custom_call.1} parent=1 // pred_check_branch
      %501 = sbr.rel (0) target = $region37
    $region36: #{tpu_custom_call.1} parent=1 // pred_region
      %502 = dma.done [#allocation4], 16
    $region37: #{tpu_custom_call.1} parent=1 // pred_fallthru
      _
    %503 = vsyncpa [#allocation4], 1

</llo_original>
